<compile_context>
chip_gen: v5e
topology: v5e:2x2
jax: 0.10.0
libtpu: 0.0.40
codegen_flags: <defaults>
</compile_context>

<pallas_src>
import functools

import jax
import jax.numpy as jnp
import numpy as np
from jax.experimental import pallas as pl
from jax.experimental.pallas import tpu as pltpu


def _round_up(x, m):
    return (x + m - 1) // m * m


def _conv_sigmoid_kernel(x_ref, w_ref, b_ref, o_ref, pad_ref, *,
                         K, stride, padding, H, W, Cin, tile_h):
    # x_ref  : (H, W*Cin)             unpadded lane-dense image (resident per batch)
    # w_ref  : (K, W*Cin, Lout)       per-kh Toeplitz weights (resident)
    # b_ref  : (1, Lout)              bias tiled over output columns (resident)
    # o_ref  : (tile_h, Lout)         lane-dense output row tile
    # pad_ref: (H + 2*padding, W*Cin) row-padded staging scratch (used iff padding>0)
    WCin = W * Cin
    Lout = o_ref.shape[1]

    h = pl.program_id(1)
    row0 = pl.multiple_of(h * (tile_h * stride), tile_h * stride)

    if padding > 0:
        # In-kernel zero row-padding: borders + interior copy (VMEM only,
        # once per image when tile_h == Ho).  Column padding is folded into
        # the Toeplitz weights, so no column writes are needed.
        zrows = jnp.zeros((padding, WCin), dtype=x_ref.dtype)
        pad_ref[pl.ds(0, padding), :] = zrows
        pad_ref[pl.ds(padding + H, padding), :] = zrows
        pad_ref[pl.ds(padding, H), :] = x_ref[...]
        src = pad_ref
    else:
        src = x_ref

    # Bias folded into the accumulator init (no per-tile VPU broadcast-add).
    acc = jnp.broadcast_to(b_ref[...], (tile_h, Lout)).astype(jnp.float32)

    # K accumulating MXU matmuls on lane-dense operands.  The (kw, ci) taps
    # and zero column-padding live in w_ref, so there is no slice/reshape/
    # concat relayout work before the matmul.
    for kh in range(K):
        if stride == 1:
            lhs = src[pl.ds(row0 + kh, tile_h), :]
        else:
            # sublane-strided row selection for stride > 1
            lhs = src[pl.ds(row0 + kh, tile_h, stride), :]
        acc = acc + jnp.dot(lhs, w_ref[kh],
                            preferred_element_type=jnp.float32)

    # sigmoid(x) = 0.5*tanh(0.5*x) + 0.5 : single EUP op, accurate.
    out = 0.5 * jnp.tanh(0.5 * acc) + 0.5
    o_ref[...] = out.astype(o_ref.dtype)


def _build_toeplitz_weights(w_khwc, Wo, W, stride, padding, Lout, dtype):
    """(K, K, Cin, Cout) HWIO weights -> (K, W*Cin, Lout) banded matrices.

    W_kh[(j*stride + kw - padding)*Cin + ci, j*Cout + co] = w[kh, kw, ci, co]
    for taps that land inside the (unpadded) image; taps that fall into the
    zero column-padding are simply dropped (equivalent to multiplying by 0).
    """
    K, _, Cin, Cout = w_khwc.shape
    shape = (K, K, Wo, Cin, Cout)
    kh = np.arange(K).reshape(K, 1, 1, 1, 1)
    kw = np.arange(K).reshape(1, K, 1, 1, 1)
    j = np.arange(Wo).reshape(1, 1, Wo, 1, 1)
    ci = np.arange(Cin).reshape(1, 1, 1, Cin, 1)
    co = np.arange(Cout).reshape(1, 1, 1, 1, Cout)

    col_in = j * stride + kw - padding
    valid = (col_in >= 0) & (col_in < W)
    row_idx = col_in * Cin + ci
    col_idx = j * Cout + co

    def flat(a):
        return np.broadcast_to(a, shape).ravel()

    sel = flat(valid)
    vals = w_khwc.astype(dtype)[flat(kh)[sel], flat(kw)[sel],
                                flat(ci)[sel], flat(co)[sel]]
    wt = jnp.zeros((K, W * Cin, Lout), dtype=dtype)
    wt = wt.at[flat(kh)[sel], flat(row_idx)[sel], flat(col_idx)[sel]].set(vals)
    return wt


def _pick_tile_h(N, Ho, fixed_bytes, out_row_bytes, budget_bytes):
    # Largest tile first (tile_h == Ho preferred); tiles must be Ho itself or
    # a multiple-of-8 divisor of Ho (BlockSpec (8,128) rule).  Keep >= 2 total
    # parallel steps when possible so v7x's two TensorCores both get work.
    cands = [Ho] + sorted((t for t in range(8, Ho, 8) if Ho % t == 0),
                          reverse=True)
    best = cands[-1]
    for t in cands:
        vmem = fixed_bytes + 2 * t * out_row_bytes  # double-buffered out tile
        if vmem > budget_bytes:
            continue
        if N * (Ho // t) >= 2:
            return t
        best = t
    return best


def cnn_block_forward(x_nchw, w_khwc, bias, *, stride, padding):
    """Conv2d(stride, padding) + Sigmoid, matching nn.Conv2d semantics.

    x_nchw : (N, Cin, H, W)    -- PyTorch layout
    w_khwc : (K, K, Cin, Cout) -- HWIO weights
    bias   : (Cout,)
    returns: (N, Cout, Ho, Wo) -- PyTorch layout
    """
    N, Cin, H, W = x_nchw.shape
    K, _, _, Cout = w_khwc.shape
    Ho = (H + 2 * padding - K) // stride + 1
    Wo = (W + 2 * padding - K) // stride + 1
    dtype = x_nchw.dtype
    itemsize = jnp.dtype(dtype).itemsize

    # Lane-dense output width, padded to a multiple of 128 -> unmasked stores
    # on all generations; the pad columns carry zero weights / zero bias and
    # are sliced off below.
    Lout = _round_up(Wo * Cout, 128)

    # Lane-dense input (Cin folded into lanes): one relayout pass in HBM.
    # TODO(synk): fuse this NCHW -> lane-dense relayout into the producer (or
    # an in-kernel gather DMA) to remove the remaining extra HBM pass.
    x_ld = jnp.transpose(x_nchw, (0, 2, 3, 1)).reshape(N, H, W * Cin)

    w_t = _build_toeplitz_weights(w_khwc, Wo, W, stride, padding, Lout, dtype)
    b_row = jnp.zeros((1, Lout), dtype=dtype).at[0, : Wo * Cout].set(
        jnp.tile(bias.astype(dtype), Wo))

    # VMEM budget -> tile_h (include rough lane/sublane padding inflation).
    def _lane(c):
        return _round_up(max(c, 1), 128)

    def _sub(r):
        return _round_up(max(r, 1), 8)

    Hp = H + 2 * padding
    fixed_bytes = (2 * _sub(H) * _lane(W * Cin)          # x block (x2 buffers)
                   + K * _sub(W * Cin) * _lane(Lout)     # Toeplitz weights
                   + _sub(1) * _lane(Lout)               # bias
                   + (_sub(Hp) * _lane(W * Cin) if padding > 0
                      else _sub(8) * _lane(128))         # pad scratch
                   ) * itemsize
    out_row_bytes = _lane(Lout) * itemsize
    tile_h = _pick_tile_h(N, Ho, fixed_bytes, out_row_bytes,
                          budget_bytes=24 * 1024 * 1024)

    pad_scratch = (pltpu.VMEM((Hp, W * Cin), dtype) if padding > 0
                   else pltpu.VMEM((8, 128), dtype))      # unused dummy

    kernel = functools.partial(
        _conv_sigmoid_kernel, K=K, stride=stride, padding=padding,
        H=H, W=W, Cin=Cin, tile_h=tile_h)

    y = pl.pallas_call(
        kernel,
        out_shape=jax.ShapeDtypeStruct((N, Ho, Lout), dtype),
        grid=(N, Ho // tile_h),
        in_specs=[
            # Per-batch lane-dense image; resident across row tiles.
            pl.BlockSpec((None, H, W * Cin), lambda n, h: (n, 0, 0)),
            # Toeplitz weights / bias resident across the whole grid.
            pl.BlockSpec((K, W * Cin, Lout), lambda n, h: (0, 0, 0)),
            pl.BlockSpec((1, Lout), lambda n, h: (0, 0)),
        ],
        out_specs=pl.BlockSpec((None, tile_h, Lout), lambda n, h: (n, h, 0)),
        scratch_shapes=[pad_scratch],
        compiler_params=pltpu.CompilerParams(
            dimension_semantics=("parallel", "parallel"),
            vmem_limit_bytes=32 * 1024 * 1024,
        ),
    )(x_ld, w_t, b_row)

    y = y[:, :, : Wo * Cout].reshape(N, Ho, Wo, Cout)
    # TODO(synk): let downstream SCCN layers consume the lane-dense
    # (N, Ho, Wo*Cout) layout directly instead of this HBM transpose to NCHW.
    return jnp.transpose(y, (0, 3, 1, 2))


if __name__ == "__main__":
    # layer_config = (kernel_size, input_channels, output_channels, stride, padding)
    kernel_size, in_ch, out_ch, stride, padding = 3, 4, 8, 1, 1
    N, H, W = 2, 16, 16

    key = jax.random.PRNGKey(0)
    kx, kw, kb = jax.random.split(key, 3)

    x = jax.random.normal(kx, (N, in_ch, H, W), dtype=jnp.float32)
    fan_in = in_ch * kernel_size * kernel_size
    w = jax.random.normal(
        kw, (kernel_size, kernel_size, in_ch, out_ch), dtype=jnp.float32
    ) * (1.0 / np.sqrt(fan_in))
    b = jax.random.uniform(
        kb, (out_ch,), dtype=jnp.float32, minval=-0.1, maxval=0.1
    )

    y = cnn_block_forward(x, w, b, stride=stride, padding=padding)
    y = jax.block_until_ready(y)

    # Reference check with XLA's conv (same semantics as nn.Conv2d + Sigmoid).
    w_oihw = jnp.transpose(w, (3, 2, 0, 1))  # HWIO -> OIHW
    y_ref = jax.lax.conv_general_dilated(
        x, w_oihw,
        window_strides=(stride, stride),
        padding=[(padding, padding), (padding, padding)],
        dimension_numbers=("NCHW", "OIHW", "NCHW"),
    ) + b.reshape(1, out_ch, 1, 1)
    y_ref = jax.nn.sigmoid(y_ref)

    assert y.shape == (N, out_ch, H, W)
    np.testing.assert_allclose(np.asarray(y), np.asarray(y_ref),
                               atol=1e-4, rtol=1e-4)

    print("KERNEL_OK")
</pallas_src>

<mosaic_0001>
module attributes {stable_mosaic.version = 11 : i64} {
  func.func @_conv_sigmoid_kernel(%arg0: i32, %arg1: i32, %arg2: memref<1x16x64xf32, #tpu.memory_space<vmem>>, %arg3: memref<3x64x128xf32, #tpu.memory_space<vmem>>, %arg4: memref<1x128xf32, #tpu.memory_space<vmem>>, %arg5: memref<1x16x128xf32, #tpu.memory_space<vmem>>, %arg6: memref<18x64xf32, #tpu.memory_space<vmem>>) attributes {dimension_semantics = [#tpu.dimension_semantics<parallel>, #tpu.dimension_semantics<parallel>], iteration_bounds = array<i64: 2, 1>, scalar_prefetch = 0 : i64, scratch_operands = 1 : i64, tpu.core_type = #tpu.core_type<tc>, window_params = [{transform_indices = @transform_0, window_bounds = array<i64: 1, 16, 64>}, {pipeline_mode = #tpu.pipeline_mode<synchronous>, transform_indices = @transform_1, window_bounds = array<i64: 3, 64, 128>}, {pipeline_mode = #tpu.pipeline_mode<synchronous>, transform_indices = @transform_2, window_bounds = array<i64: 1, 128>}, {transform_indices = @transform_3, window_bounds = array<i64: 1, 16, 128>}]} {
    %c16_i32 = arith.constant 16 : i32
    %0 = arith.muli %arg1, %c16_i32 : i32
    %1 = tpu.assume_multiple %0, 16 : i32
    %cst = arith.constant 0.000000e+00 : f32
    %2 = vector.broadcast %cst : f32 to vector<1x64xf32>
    %c0 = arith.constant 0 : index
    %c0_0 = arith.constant 0 : index
    %3 = vector.load %arg6[%c0, %c0_0] : memref<18x64xf32, #tpu.memory_space<vmem>>, vector<1x64xf32>
    tpu.vector_store %arg6[%c0, %c0_0], %2 {strides = array<i32>} : memref<18x64xf32, #tpu.memory_space<vmem>>, vector<1x64xf32>,
    %c17 = arith.constant 17 : index
    %c0_1 = arith.constant 0 : index
    %4 = vector.load %arg6[%c17, %c0_1] : memref<18x64xf32, #tpu.memory_space<vmem>>, vector<1x64xf32>
    tpu.vector_store %arg6[%c17, %c0_1], %2 {strides = array<i32>} : memref<18x64xf32, #tpu.memory_space<vmem>>, vector<1x64xf32>,
    %c0_2 = arith.constant 0 : index
    %c0_3 = arith.constant 0 : index
    %c0_4 = arith.constant 0 : index
    %5 = vector.load %arg2[%c0_2, %c0_3, %c0_4] : memref<1x16x64xf32, #tpu.memory_space<vmem>>, vector<1x16x64xf32>
    %6 = vector.shape_cast %5 : vector<1x16x64xf32> to vector<16x64xf32>
    %c1 = arith.constant 1 : index
    %c0_5 = arith.constant 0 : index
    %7 = vector.load %arg6[%c1, %c0_5] : memref<18x64xf32, #tpu.memory_space<vmem>>, vector<16x64xf32>
    tpu.vector_store %arg6[%c1, %c0_5], %6 {strides = array<i32>} : memref<18x64xf32, #tpu.memory_space<vmem>>, vector<16x64xf32>,
    %c0_6 = arith.constant 0 : index
    %c0_7 = arith.constant 0 : index
    %8 = vector.load %arg4[%c0_6, %c0_7] : memref<1x128xf32, #tpu.memory_space<vmem>>, vector<1x128xf32>
    %9 = vector.shape_cast %8 : vector<1x128xf32> to vector<1x128xf32>
    %10 = vector.broadcast %9 : vector<1x128xf32> to vector<16x128xf32>
    %c0_i32 = arith.constant 0 : i32
    %11 = arith.addi %1, %c0_i32 : i32
    %12 = arith.index_cast %11 : i32 to index
    %c0_8 = arith.constant 0 : index
    %13 = vector.load %arg6[%12, %c0_8] : memref<18x64xf32, #tpu.memory_space<vmem>>, vector<16x64xf32>
    %c0_9 = arith.constant 0 : index
    %c0_10 = arith.constant 0 : index
    %c0_11 = arith.constant 0 : index
    %14 = vector.load %arg3[%c0_9, %c0_10, %c0_11] : memref<3x64x128xf32, #tpu.memory_space<vmem>>, vector<1x64x128xf32>
    %15 = vector.shape_cast %14 : vector<1x64x128xf32> to vector<64x128xf32>
    %cst_12 = arith.constant dense<0.000000e+00> : vector<16x128xf32>
    %16 = tpu.matmul %13, %15, %cst_12 {dimension_numbers = #tpu.dot_dimension_numbers<[1], [0], [0], [1], [0, 0, 1, 1], [], []>} : vector<16x64xf32>, vector<64x128xf32>, vector<16x128xf32> -> vector<16x128xf32>
    %17 = arith.addf %10, %16 : vector<16x128xf32>
    %c1_i32 = arith.constant 1 : i32
    %18 = arith.addi %1, %c1_i32 : i32
    %19 = arith.index_cast %18 : i32 to index
    %c0_13 = arith.constant 0 : index
    %20 = vector.load %arg6[%19, %c0_13] : memref<18x64xf32, #tpu.memory_space<vmem>>, vector<16x64xf32>
    %c1_14 = arith.constant 1 : index
    %c0_15 = arith.constant 0 : index
    %c0_16 = arith.constant 0 : index
    %21 = vector.load %arg3[%c1_14, %c0_15, %c0_16] : memref<3x64x128xf32, #tpu.memory_space<vmem>>, vector<1x64x128xf32>
    %22 = vector.shape_cast %21 : vector<1x64x128xf32> to vector<64x128xf32>
    %cst_17 = arith.constant dense<0.000000e+00> : vector<16x128xf32>
    %23 = tpu.matmul %20, %22, %cst_17 {dimension_numbers = #tpu.dot_dimension_numbers<[1], [0], [0], [1], [0, 0, 1, 1], [], []>} : vector<16x64xf32>, vector<64x128xf32>, vector<16x128xf32> -> vector<16x128xf32>
    %24 = arith.addf %17, %23 : vector<16x128xf32>
    %c2_i32 = arith.constant 2 : i32
    %25 = arith.addi %1, %c2_i32 : i32
    %26 = arith.index_cast %25 : i32 to index
    %c0_18 = arith.constant 0 : index
    %27 = vector.load %arg6[%26, %c0_18] : memref<18x64xf32, #tpu.memory_space<vmem>>, vector<16x64xf32>
    %c2 = arith.constant 2 : index
    %c0_19 = arith.constant 0 : index
    %c0_20 = arith.constant 0 : index
    %28 = vector.load %arg3[%c2, %c0_19, %c0_20] : memref<3x64x128xf32, #tpu.memory_space<vmem>>, vector<1x64x128xf32>
    %29 = vector.shape_cast %28 : vector<1x64x128xf32> to vector<64x128xf32>
    %cst_21 = arith.constant dense<0.000000e+00> : vector<16x128xf32>
    %30 = tpu.matmul %27, %29, %cst_21 {dimension_numbers = #tpu.dot_dimension_numbers<[1], [0], [0], [1], [0, 0, 1, 1], [], []>} : vector<16x64xf32>, vector<64x128xf32>, vector<16x128xf32> -> vector<16x128xf32>
    %31 = arith.addf %24, %30 : vector<16x128xf32>
    %cst_22 = arith.constant 5.000000e-01 : f32
    %32 = vector.broadcast %cst_22 : f32 to vector<16x128xf32>
    %33 = arith.mulf %32, %31 : vector<16x128xf32>
    %34 = math.tanh %33 : vector<16x128xf32>
    %cst_23 = arith.constant 5.000000e-01 : f32
    %35 = vector.broadcast %cst_23 : f32 to vector<16x128xf32>
    %36 = arith.mulf %35, %34 : vector<16x128xf32>
    %cst_24 = arith.constant 5.000000e-01 : f32
    %37 = vector.broadcast %cst_24 : f32 to vector<16x128xf32>
    %38 = arith.addf %36, %37 : vector<16x128xf32>
    %c0_25 = arith.constant 0 : index
    %c0_26 = arith.constant 0 : index
    %c0_27 = arith.constant 0 : index
    %39 = vector.load %arg5[%c0_25, %c0_26, %c0_27] : memref<1x16x128xf32, #tpu.memory_space<vmem>>, vector<1x16x128xf32>
    %40 = vector.shape_cast %39 : vector<1x16x128xf32> to vector<16x128xf32>
    %41 = vector.shape_cast %38 : vector<16x128xf32> to vector<1x16x128xf32>
    tpu.vector_store %arg5[%c0_25, %c0_26, %c0_27], %41 {strides = array<i32>} : memref<1x16x128xf32, #tpu.memory_space<vmem>>, vector<1x16x128xf32>,
    return
  }
  func.func @transform_0(%arg0: i32, %arg1: i32) -> (i32, i32, i32) {
    %c0_i32 = arith.constant 0 : i32
    %c0_i32_0 = arith.constant 0 : i32
    %c0_i32_1 = arith.constant 0 : i32
    return %arg0, %c0_i32, %c0_i32_0 : i32, i32, i32
  }
  func.func @transform_1(%arg0: i32, %arg1: i32) -> (i32, i32, i32) {
    %c0_i32 = arith.constant 0 : i32
    %c0_i32_0 = arith.constant 0 : i32
    %c0_i32_1 = arith.constant 0 : i32
    %c0_i32_2 = arith.constant 0 : i32
    return %c0_i32, %c0_i32_0, %c0_i32_1 : i32, i32, i32
  }
  func.func @transform_2(%arg0: i32, %arg1: i32) -> (i32, i32) {
    %c0_i32 = arith.constant 0 : i32
    %c0_i32_0 = arith.constant 0 : i32
    %c0_i32_1 = arith.constant 0 : i32
    return %c0_i32, %c0_i32_0 : i32, i32
  }
  func.func @transform_3(%arg0: i32, %arg1: i32) -> (i32, i32, i32) {
    %c0_i32 = arith.constant 0 : i32
    %c0_i32_0 = arith.constant 0 : i32
    return %arg0, %arg1, %c0_i32 : i32, i32, i32
  }
}

</mosaic_0001>

<llo_original>
// kernel: tpu_custom_call.1
$region0: #{tpu_custom_call.1}
  #allocation0 [shape = 'u32[]', space=smem, size = 0x4, offset = 0x4, fixed_abs, tag = 'smem constant byte address 0x4 - core index']
  #allocation1 [shape = 'u32[72,128]{1,0:T(1,128)}', space=vmem, size = 0x9000, scoped, tag = 'internal scratch']
  #allocation2 [shape = 'f32[18,64]{1,0:T(8,128)}', space=vmem, size = 0x3000, scoped, tag = 'scratch operand']
  %s0 = inlined_call_operand.hbm [shape: f32[2,16,64], index: 0, kind: input, shape index: {}]
  %s1 = inlined_call_operand.hbm [shape: f32[3,64,128], index: 1, kind: input, shape index: {}]
  %s2 = inlined_call_operand.vmem [shape: f32[1,128], index: 2, kind: input, shape index: {}]
  %s3 = inlined_call_operand.hbm [shape: f32[2,16,128], index: 3, kind: output, shape index: {}]
  %s4 = sld [smem:[#allocation0]]
  $region53: #{tpu_custom_call.1} parent=0
    _
  %s6 = ssub.s32 1, %s4
  %s7 = scalar_select 0, %s6, %s4
  $region1: #{tpu_custom_call.1} parent=0
    #allocation3 [shape = 'u8[16384]{0}', space=vmem, size = 0x4000, scoped, tag = 'input window, operand 0']
    #allocation4 [shape = 's32[2]{0}', space=sflag, size = 0x8, scoped, tag = 'scoped memory for tpu_custom_call.1']
    #allocation5 [shape = 's32[2]{0}', space=sflag, size = 0x8, scoped, tag = 'scoped memory for tpu_custom_call.1']
    #allocation6 [shape = 'u8[98304]{0}', space=vmem, size = 0x18000, scoped, tag = 'input window, operand 1, single buffered']
    #allocation7 [shape = 's32[1]{0}', space=sflag, size = 0x4, scoped, tag = 'scoped memory for tpu_custom_call.1']
    #allocation8 [shape = 'u8[16384]{0}', space=vmem, size = 0x4000, scoped, tag = 'output window, operand 0']
    %8 = vsyncpa [#allocation4], 0
    %s9 = scalar_lea.sflag [#allocation4], 1
    %10 = vsyncpa %s9, 0
    %11 = vsyncpa [#allocation7], 0
    %12 = vsyncpa [#allocation5], 0
    %s13 = scalar_lea.sflag [#allocation5], 1
    %14 = vsyncpa %s13, 0
    loop: start=0, step=1, limit=4
    $region2: #{tpu_custom_call.1} parent=1 // loop_pre_header
      _
    $region3: #{tpu_custom_call.1} parent=1 // loop_header
      %s16 = sphi 0, %s20
      %p17 = scmp.ge.s32.totalorder %s16, 4
      %s23 = sphi 0, %s35
      %s24 = sphi 0, %s31
      %s25 = sphi 0, %s23
      %s26 = sphi 0, %s24
      %s27 = sphi 0, %s25
      %s28 = sphi 0, %s26
      %s38 = sphi 0, %s40
      %s41 = sphi 0, %s38
      %s42 = sphi 0, %s41
      %s58 = sphi 0, %s42
      %s62 = sphi 0, %s62
      %s64 = sphi 0, %s62
      %s65 = sphi 0, %s64
      %s79 = sphi 0, %s65
      %s83 = sphi 0, %s83
      %s85 = sphi 0, %s83
      %s86 = sphi 0, %s85
      %s100 = sphi 0, %s86
      %s108 = sphi 0, %s110
      %s111 = sphi 0, %s108
      %s112 = sphi 0, %s111
      %s128 = sphi 0, %s112
    $region4: #{tpu_custom_call.1} parent=1 // loop_header_branch
      %19 = sbr.rel (%p17) target = $region8
    $region5: #{tpu_custom_call.1} parent=1 // loop_body
      %s21 = ssub.s32 %s16, 1
      %s22 = ssub.s32 %s16, 2
      %s29 = sadd.s32 1, %s24
      %p30 = scmp.ge.s32.totalorder %s29, 1
      %s31 = scalar_select %p30, 0, %s29
      %s32 = sadd.s32 1, %s23
      %s33 = scalar_select %p30, %s32, %s23
      %p34 = scmp.ge.s32.totalorder %s33, 2
      %s35 = scalar_select %p34, 0, %s33
      %s36 = ssub.s32 %s23, %s35
      %p37 = scmp.eq.s32.totalorder %s36, 0
      %s39 = sadd.s32 %s38, 1
      %s40 = scalar_select %p37, %s38, %s39
      %p43 = pneg %p37
      %p44 = scmp.eq.s32.totalorder %s16, 1
      %p45 = por %p43, %p44
      %p46 = scmp.ne.s32.totalorder %s38, %s41
      %p47 = scmp.eq.s32.totalorder %s16, 0
      %p48 = por %p46, %p47
      %p49 = scmp.ne.s32.totalorder %s38, %s41
      %p50 = scmp.eq.s32.totalorder %s21, 1
      %p51 = por %p49, %p50
      %p52 = scmp.ne.s32.totalorder %s41, %s42
      %p53 = scmp.eq.s32.totalorder %s21, 0
      %p54 = por %p52, %p53
      %p55 = scmp.ne.s32.totalorder %s41, %s42
      %p56 = scmp.eq.s32.totalorder %s22, 1
      %p57 = por %p55, %p56
      %p59 = scmp.ne.s32.totalorder %s42, %s58
      %p60 = scmp.eq.s32.totalorder %s22, 0
      %p61 = por %p59, %p60
      %s63 = sadd.s32 %s62, 1
      %p66 = scmp.eq.s32.totalorder %s16, 1
      %p67 = scmp.ne.s32.totalorder %s62, %s64
      %p68 = scmp.eq.s32.totalorder %s16, 0
      %p69 = por %p67, %p68
      %p70 = scmp.ne.s32.totalorder %s62, %s64
      %p71 = scmp.eq.s32.totalorder %s21, 1
      %p72 = por %p70, %p71
      %p73 = scmp.ne.s32.totalorder %s64, %s65
      %p74 = scmp.eq.s32.totalorder %s21, 0
      %p75 = por %p73, %p74
      %p76 = scmp.ne.s32.totalorder %s64, %s65
      %p77 = scmp.eq.s32.totalorder %s22, 1
      %p78 = por %p76, %p77
      %p80 = scmp.ne.s32.totalorder %s65, %s79
      %p81 = scmp.eq.s32.totalorder %s22, 0
      %p82 = por %p80, %p81
      %s84 = sadd.s32 %s83, 1
      %p87 = scmp.eq.s32.totalorder %s16, 1
      %p88 = scmp.ne.s32.totalorder %s83, %s85
      %p89 = scmp.eq.s32.totalorder %s16, 0
      %p90 = por %p88, %p89
      %p91 = scmp.ne.s32.totalorder %s83, %s85
      %p92 = scmp.eq.s32.totalorder %s21, 1
      %p93 = por %p91, %p92
      %p94 = scmp.ne.s32.totalorder %s85, %s86
      %p95 = scmp.eq.s32.totalorder %s21, 0
      %p96 = por %p94, %p95
      %p97 = scmp.ne.s32.totalorder %s85, %s86
      %p98 = scmp.eq.s32.totalorder %s22, 1
      %p99 = por %p97, %p98
      %p101 = scmp.ne.s32.totalorder %s86, %s100
      %p102 = scmp.eq.s32.totalorder %s22, 0
      %p103 = por %p101, %p102
      %s104 = ssub.s32 %s23, %s35
      %s105 = ssub.s32 %s24, %s31
      %s106 = sor.u32 %s104, %s105
      %p107 = scmp.eq.s32.totalorder %s106, 0
      %s109 = sadd.s32 %s108, 1
      %s110 = scalar_select %p107, %s108, %s109
      %p113 = pneg %p107
      %p114 = scmp.eq.s32.totalorder %s16, 1
      %p115 = por %p113, %p114
      %p116 = scmp.ne.s32.totalorder %s108, %s111
      %p117 = scmp.eq.s32.totalorder %s16, 0
      %p118 = por %p116, %p117
      %p119 = scmp.ne.s32.totalorder %s108, %s111
      %p120 = scmp.eq.s32.totalorder %s21, 1
      %p121 = por %p119, %p120
      %p122 = scmp.ne.s32.totalorder %s111, %s112
      %p123 = scmp.eq.s32.totalorder %s21, 0
      %p124 = por %p122, %p123
      %p125 = scmp.ne.s32.totalorder %s111, %s112
      %p126 = scmp.eq.s32.totalorder %s22, 1
      %p127 = por %p125, %p126
      %p129 = scmp.ne.s32.totalorder %s112, %s128
      %p130 = scmp.eq.s32.totalorder %s22, 0
      %p131 = por %p129, %p130
      %p132 = scmp.le.s32.totalorder 1, %s16
      %p133 = scmp.lt.s32.totalorder %s16, 3
      %p134 = pnand %p132, %p133
      %p135 = pneg %p134
      // Predicated region
      $region9: #{tpu_custom_call.1} parent=5 // pred_check
        _
      $region10: #{tpu_custom_call.1} parent=5 // pred_check_branch
        %137 = sbr.rel (%p134) target = $region12
      $region11: #{tpu_custom_call.1} parent=5 // pred_region
        %s138 = ssub.s32 %s16, 1
        // Predicated region
        $region13: #{tpu_custom_call.1} parent=11 // pred_check
          %p139 = pneg %p75
        $region14: #{tpu_custom_call.1} parent=11 // pred_check_branch
          %141 = sbr.rel (%p139) target = $region16
        $region15: #{tpu_custom_call.1} parent=11 // pred_region
          %143 = vsyncadd [#allocation7], 0
          %s144 = sshll.u32 %s1, 4
          %s145 = int_to_ptr.hbm [resolvable:$true] %s144
          %s146 = sshll.u32 [#allocation6], 4
          %s147 = int_to_ptr.vmem [resolvable:$true] %s146
          %152 = dma.hbm_to_vmem [thread:$0]  %s145, 3072, %s147, [#allocation7], 128, 128, 8
        $region16: #{tpu_custom_call.1} parent=11 // pred_fallthru
          _
        // Predicated region
        $region17: #{tpu_custom_call.1} parent=11 // pred_check
          %p153 = pneg %p96
        $region18: #{tpu_custom_call.1} parent=11 // pred_check_branch
          %155 = sbr.rel (%p153) target = $region20
        $region19: #{tpu_custom_call.1} parent=11 // pred_region
          _
        $region20: #{tpu_custom_call.1} parent=11 // pred_fallthru
          _
      $region12: #{tpu_custom_call.1} parent=5 // pred_fallthru
        _
      %p156 = scmp.lt.s32.totalorder %s16, 2
      // Predicated region
      $region21: #{tpu_custom_call.1} parent=5 // pred_check
        %p157 = pneg %p156
      $region22: #{tpu_custom_call.1} parent=5 // pred_check_branch
        %159 = sbr.rel (%p157) target = $region24
      $region23: #{tpu_custom_call.1} parent=5 // pred_region
        // Predicated region
        $region25: #{tpu_custom_call.1} parent=23 // pred_check
          %p160 = pneg %p48
        $region26: #{tpu_custom_call.1} parent=23 // pred_check_branch
          %162 = sbr.rel (%p160) target = $region28
        $region27: #{tpu_custom_call.1} parent=23 // pred_region
          %s163 = sand.u32 %s38, 1
          %s164 = scalar_lea.sflag [#allocation4], %s163
          %s165 = sand.u32 %s38, 1
          %s166 = smul.addr %s165, 16
          %s167 = scalar_lea.vmem [#allocation3], %s166
          %169 = vsyncadd %s164, 0
          %s170 = smul.addr %s23, 2
          %s171 = smul.addr %s170, 8
          %s172 = scalar_lea.hbm %s0, %s171
          %s173 = sshll.u32 %s172, 4
          %s174 = int_to_ptr.hbm [resolvable:$true] %s173
          %s175 = sshll.u32 %s167, 4
          %s176 = int_to_ptr.vmem [resolvable:$true] %s175
          %181 = dma.hbm_to_vmem [thread:$0]  %s174, 256, %s176, %s164, 128, 128, 8
        $region28: #{tpu_custom_call.1} parent=23 // pred_fallthru
          _
      $region24: #{tpu_custom_call.1} parent=5 // pred_fallthru
        _
      %p182 = scmp.le.s32.totalorder 1, %s16
      %p183 = scmp.lt.s32.totalorder %s16, 3
      %p184 = pnand %p182, %p183
      %p185 = pneg %p184
      // Predicated region
      $region29: #{tpu_custom_call.1} parent=5 // pred_check
        _
      $region30: #{tpu_custom_call.1} parent=5 // pred_check_branch
        %187 = sbr.rel (%p184) target = $region32
      $region31: #{tpu_custom_call.1} parent=5 // pred_region
        %s188 = ssub.s32 %s16, 1
        %s189 = sand.u32 %s41, 1
        %s190 = scalar_lea.sflag [#allocation4], %s189
        %s191 = sand.u32 %s41, 1
        %s192 = smul.addr %s191, 16
        %s193 = scalar_lea.vmem [#allocation3], %s192
        // Predicated region
        $region33: #{tpu_custom_call.1} parent=31 // pred_check
          %p194 = pneg %p54
        $region34: #{tpu_custom_call.1} parent=31 // pred_check_branch
          %196 = sbr.rel (%p194) target = $region36
        $region35: #{tpu_custom_call.1} parent=31 // pred_region
          %198 = dma.done %s190, 256
        $region36: #{tpu_custom_call.1} parent=31 // pred_fallthru
          _
        // Predicated region
        $region37: #{tpu_custom_call.1} parent=31 // pred_check
          %p199 = pneg %p75
        $region38: #{tpu_custom_call.1} parent=31 // pred_check_branch
          %201 = sbr.rel (%p199) target = $region40
        $region39: #{tpu_custom_call.1} parent=31 // pred_region
          %203 = dma.done [#allocation7], 3072
        $region40: #{tpu_custom_call.1} parent=31 // pred_fallthru
          _
        %s204 = sand.u32 %s41, 1
        %s205 = scalar_lea.sflag [#allocation4], %s204
        %s206 = sand.u32 %s41, 1
        %s207 = smul.addr %s206, 16
        %s208 = scalar_lea.vmem [#allocation3], %s207
        %p209 = pneg %p54
        %p210 = pneg %p51
        %p211 = pneg %p75
        %p212 = pneg %p72
        %p213 = pneg %p96
        %p214 = pneg %p93
        %p215 = pneg %p124
        %p216 = pneg %p121
        %s217 = sand.u32 %s111, 1
        %s218 = scalar_lea.sflag [#allocation5], %s217
        %s219 = sand.u32 %s111, 1
        %s220 = smul.addr %s219, 16
        %s221 = scalar_lea.vmem [#allocation8], %s220
        %s222 = smul.u32 2, %s26
        %s223 = smul.u32 %s26, 16
        %vm224 = vcmask 516096
        %225 = vst.msk [vmem:[#allocation2] sm:$0x1] %vm224, 0.0
        %226 = vst.msk [vmem:[#allocation2 + $0x11] sm:$0x1] %vm224, 0.0
        %v227 = vld [vmem:[%s193] sm:$0xff]
        %v228 = vld [vmem:[%s193 + $0x8] sm:$0xff]
        %vm229 = vcmask 523264
        %230 = vst.msk [vmem:[#allocation2 + $0x1] sm:$0xff] %vm229, %v227
        %231 = vst.msk [vmem:[#allocation2 + $0x9] sm:$0xff] %vm229, %v228
        %v232 = vld [vmem:[%s2] sm:$0x1]
        %v234 = vperm.slane %v232, 0
        %s236 = scalar_lea.vmem [#allocation2], %s223
        %v237 = vld [vmem:[%s236] sm:$0xff]
        %v238 = vld [vmem:[%s236 + $0x8] sm:$0xff]
        %v239 = vld [vmem:[#allocation6] sm:$0xff]
        %v240 = vld [vmem:[#allocation6 + $0x8] sm:$0xff]
        %v241 = vld [vmem:[#allocation6 + $0x10] sm:$0xff]
        %v242 = vld [vmem:[#allocation6 + $0x18] sm:$0xff]
        %v243 = vld [vmem:[#allocation6 + $0x20] sm:$0xff]
        %v244 = vld [vmem:[#allocation6 + $0x28] sm:$0xff]
        %v245 = vld [vmem:[#allocation6 + $0x30] sm:$0xff]
        %v246 = vld [vmem:[#allocation6 + $0x38] sm:$0xff]
        %v248 = vsel %vm229, %v237, 0
        %v251 = vsel %vm229, %v238, 0
        %253 = vmatpush.msra.mxu0 0.0
        %254 = vmatpush.msra.mxu0 0.0
        %255 = vmatpush.msra.mxu0 0.0
        %256 = vmatpush.msra.mxu0 0.0
        %257 = vmatpush.msra.mxu0 0.0
        %258 = vmatpush.msra.mxu0 0.0
        %259 = vmatpush.msra.mxu0 0.0
        %260 = vmatpush.msra.mxu0 0.0
        %261 = vmatpush.msra.mxu0 %v246
        %262 = vmatpush.msra.mxu0 %v245
        %263 = vmatpush.msra.mxu0 %v244
        %264 = vmatpush.msra.mxu0 %v243
        %265 = vmatpush.msra.mxu0 %v242
        %266 = vmatpush.msra.mxu0 %v241
        %267 = vmatpush.msra.mxu0 %v240
        %268 = vmatpush.msra.mxu0 %v239
        %269 = vmatmul.f32.gmra.mxu0 %v248
        %v270 = vpop.f32.mrf.mxu0
        %v271 = vadd.f32 0.0, %v270
        %272 = vmatmul.f32.gmra.mxu0 %v251
        %v273 = vpop.f32.mrf.mxu0
        %v274 = vadd.f32 0.0, %v273
        %275 = vdwg.mxu0
        %v276 = vadd.f32 %v234, %v271
        %v277 = vadd.f32 %v234, %v274
        %s278 = sadd.s32 %s223, 1
        %s279 = scalar_lea.vmem [#allocation2], %s278
        %v280 = vld [vmem:[%s279] sm:$0xff]
        %v281 = vld [vmem:[%s279 + $0x8] sm:$0xff]
        %s282 = scalar_lea.vmem [#allocation6], 64
        %v283 = vld [vmem:[%s282] sm:$0xff]
        %v284 = vld [vmem:[%s282 + $0x8] sm:$0xff]
        %v285 = vld [vmem:[%s282 + $0x10] sm:$0xff]
        %v286 = vld [vmem:[%s282 + $0x18] sm:$0xff]
        %v287 = vld [vmem:[%s282 + $0x20] sm:$0xff]
        %v288 = vld [vmem:[%s282 + $0x28] sm:$0xff]
        %v289 = vld [vmem:[%s282 + $0x30] sm:$0xff]
        %v290 = vld [vmem:[%s282 + $0x38] sm:$0xff]
        %v292 = vsel %vm229, %v280, 0
        %v295 = vsel %vm229, %v281, 0
        %297 = vmatpush.msra.mxu0 0.0
        %298 = vmatpush.msra.mxu0 0.0
        %299 = vmatpush.msra.mxu0 0.0
        %300 = vmatpush.msra.mxu0 0.0
        %301 = vmatpush.msra.mxu0 0.0
        %302 = vmatpush.msra.mxu0 0.0
        %303 = vmatpush.msra.mxu0 0.0
        %304 = vmatpush.msra.mxu0 0.0
        %305 = vmatpush.msra.mxu0 %v290
        %306 = vmatpush.msra.mxu0 %v289
        %307 = vmatpush.msra.mxu0 %v288
        %308 = vmatpush.msra.mxu0 %v287
        %309 = vmatpush.msra.mxu0 %v286
        %310 = vmatpush.msra.mxu0 %v285
        %311 = vmatpush.msra.mxu0 %v284
        %312 = vmatpush.msra.mxu0 %v283
        %313 = vmatmul.f32.gmra.mxu0 %v292
        %v314 = vpop.f32.mrf.mxu0
        %v315 = vadd.f32 0.0, %v314
        %316 = vmatmul.f32.gmra.mxu0 %v295
        %v317 = vpop.f32.mrf.mxu0
        %v318 = vadd.f32 0.0, %v317
        %319 = vdwg.mxu0
        %v320 = vadd.f32 %v276, %v315
        %v321 = vadd.f32 %v277, %v318
        %s322 = sadd.s32 %s223, 2
        %s323 = scalar_lea.vmem [#allocation2], %s322
        %v324 = vld [vmem:[%s323] sm:$0xff]
        %v325 = vld [vmem:[%s323 + $0x8] sm:$0xff]
        %s326 = scalar_lea.vmem [#allocation6], 128
        %v327 = vld [vmem:[%s326] sm:$0xff]
        %v328 = vld [vmem:[%s326 + $0x8] sm:$0xff]
        %v329 = vld [vmem:[%s326 + $0x10] sm:$0xff]
        %v330 = vld [vmem:[%s326 + $0x18] sm:$0xff]
        %v331 = vld [vmem:[%s326 + $0x20] sm:$0xff]
        %v332 = vld [vmem:[%s326 + $0x28] sm:$0xff]
        %v333 = vld [vmem:[%s326 + $0x30] sm:$0xff]
        %v334 = vld [vmem:[%s326 + $0x38] sm:$0xff]
        %v336 = vsel %vm229, %v324, 0
        %v339 = vsel %vm229, %v325, 0
        %341 = vmatpush.msra.mxu0 0.0
        %342 = vmatpush.msra.mxu0 0.0
        %343 = vmatpush.msra.mxu0 0.0
        %344 = vmatpush.msra.mxu0 0.0
        %345 = vmatpush.msra.mxu0 0.0
        %346 = vmatpush.msra.mxu0 0.0
        %347 = vmatpush.msra.mxu0 0.0
        %348 = vmatpush.msra.mxu0 0.0
        %349 = vmatpush.msra.mxu0 %v334
        %350 = vmatpush.msra.mxu0 %v333
        %351 = vmatpush.msra.mxu0 %v332
        %352 = vmatpush.msra.mxu0 %v331
        %353 = vmatpush.msra.mxu0 %v330
        %354 = vmatpush.msra.mxu0 %v329
        %355 = vmatpush.msra.mxu0 %v328
        %356 = vmatpush.msra.mxu0 %v327
        %357 = vmatmul.f32.gmra.mxu0 %v336
        %v358 = vpop.f32.mrf.mxu0
        %v359 = vadd.f32 0.0, %v358
        %360 = vmatmul.f32.gmra.mxu0 %v339
        %v361 = vpop.f32.mrf.mxu0
        %v362 = vadd.f32 0.0, %v361
        %363 = vdwg.mxu0
        %v364 = vadd.f32 %v320, %v359
        %v365 = vadd.f32 %v321, %v362
        %v366 = vmul.f32 %v364, 0.5
        %v367 = vmul.f32 %v365, 0.5
        %v368 = vtanh.pop %v366
        %v369 = vtanh.pop %v367
        %v370 = vmul.f32 %v368, 0.5
        %v371 = vmul.f32 %v369, 0.5
        %v372 = vadd.f32 %v370, 0.5
        %v373 = vadd.f32 %v371, 0.5
        %374 = vst [vmem:[%s221] sm:$0xff] %v372
        %375 = vst [vmem:[%s221 + $0x8] sm:$0xff] %v373
        %s376 = sand.u32 %s111, 1
        %s377 = scalar_lea.sflag [#allocation5], %s376
        %s378 = sand.u32 %s111, 1
        %s379 = smul.addr %s378, 16
        %s380 = scalar_lea.vmem [#allocation8], %s379
        // Predicated region
        $region41: #{tpu_custom_call.1} parent=31 // pred_check
          %p381 = pneg %p121
        $region42: #{tpu_custom_call.1} parent=31 // pred_check_branch
          %383 = sbr.rel (%p381) target = $region44
        $region43: #{tpu_custom_call.1} parent=31 // pred_region
          %s384 = smul.u32 2, %s26
          %386 = vsyncadd %s377, 0
          %s387 = smul.addr %s25, 2
          %s388 = sadd.s32 %s384, %s387
          %s389 = smul.addr %s388, 8
          %s390 = scalar_lea.hbm %s3, %s389
          %s391 = sshll.u32 %s380, 4
          %s392 = int_to_ptr.vmem [resolvable:$true] %s391
          %s393 = sshll.u32 %s390, 4
          %s394 = int_to_ptr.hbm [resolvable:$true] %s393
          %399 = dma.vmem_to_hbm [thread:$0]  %s392, 256, %s394, %s377, 128, 128, 8
        $region44: #{tpu_custom_call.1} parent=31 // pred_fallthru
          _
      $region32: #{tpu_custom_call.1} parent=5 // pred_fallthru
        _
      %p400 = scmp.le.s32.totalorder 2, %s16
      // Predicated region
      $region45: #{tpu_custom_call.1} parent=5 // pred_check
        %p401 = pneg %p400
      $region46: #{tpu_custom_call.1} parent=5 // pred_check_branch
        %403 = sbr.rel (%p401) target = $region48
      $region47: #{tpu_custom_call.1} parent=5 // pred_region
        %s404 = ssub.s32 %s16, 2
        // Predicated region
        $region49: #{tpu_custom_call.1} parent=47 // pred_check
          %p405 = pneg %p127
        $region50: #{tpu_custom_call.1} parent=47 // pred_check_branch
          %407 = sbr.rel (%p405) target = $region52
        $region51: #{tpu_custom_call.1} parent=47 // pred_region
          %s408 = sand.u32 %s112, 1
          %s409 = scalar_lea.sflag [#allocation5], %s408
          %s410 = sand.u32 %s112, 1
          %s411 = smul.addr %s410, 16
          %s412 = scalar_lea.vmem [#allocation8], %s411
          %414 = dma.done %s409, 256
        $region52: #{tpu_custom_call.1} parent=47 // pred_fallthru
          _
      $region48: #{tpu_custom_call.1} parent=5 // pred_fallthru
        _
    $region6: #{tpu_custom_call.1} parent=1 // loop_footer
      %s20 = sadd.s32 1, %s16
    $region7: #{tpu_custom_call.1} parent=1 // loop_footer_branch
      %15 = sbr.rel target = $region3
    $region8: #{tpu_custom_call.1} parent=1 // loop_exit
      _
    %415 = vsyncpa [#allocation4], 1
    %s416 = scalar_lea.sflag [#allocation4], 1
    %417 = vsyncpa %s416, 1
    %418 = vsyncpa [#allocation7], 1
    %419 = vsyncpa [#allocation5], 1
    %s420 = scalar_lea.sflag [#allocation5], 1
    %421 = vsyncpa %s420, 1

</llo_original>
